<compile_context>
chip_gen: v7x
topology: tpu7x:2x2x1
jax: 0.10.0
libtpu: 0.0.40
codegen_flags: <defaults>
</compile_context>

<pallas_src>
import functools

import jax
import jax.numpy as jnp
import numpy as np
from jax.experimental import pallas as pl
from jax.experimental.pallas import tpu as pltpu


def _round_up(x, m):
    return ((x + m - 1) // m) * m


def _cdiv(a, b):
    return -(-a // b)


def _balanced_tile(total, cap, quantum=128):
    """Largest tile <= cap (multiple of quantum) that balances blocks over total."""
    total_q = _round_up(max(total, 1), quantum) // quantum
    cap_q = max(1, min(cap // quantum, total_q))
    nblk = _cdiv(total_q, cap_q)
    return quantum * _cdiv(total_q, nblk)


def _pick_budget():
    """(per-input block bytes, vmem_limit_bytes) tuned per TPU generation."""
    vmem = None
    try:
        vmem = getattr(pltpu.get_tpu_info(), "vmem_capacity_bytes", None)
    except Exception:  # pragma: no cover - conservative fallback
        vmem = None
    if vmem is not None and vmem >= 100 * 1024 * 1024:
        # v5e / v6e: 128 MiB physical VMEM -> bigger blocks amortize per-step overhead.
        return 4 * 1024 * 1024, 64 * 1024 * 1024
    # v7x (64 MiB physical VMEM) or unknown: 2 MiB blocks already sit on the
    # DMA-efficiency knee; keep total buffering well under 32 MiB.
    return 2 * 1024 * 1024, 32 * 1024 * 1024


def _acc_partials_kernel(fc_ref, tr_ref, cl_ref, out_ref, *,
                         std, mean, rows_total, lanes_total,
                         block_rows, block_lanes,
                         mask_rows, mask_lanes, rows_axis):
    fc = fc_ref[...].astype(jnp.float32)
    tr = tr_ref[...].astype(jnp.float32)
    cl = cl_ref[...].astype(jnp.float32)

    fa = fc * std + mean - cl          # forecast anomaly (un-centered)
    a = tr * std + mean - cl           # truth anomaly (un-centered)

    # Edge-block masking (static decision; not traced when tiles divide exactly,
    # which is the case for the demo shape).  jnp.where (not multiply) so stale
    # garbage (possibly inf/nan) in the out-of-bounds region cannot leak in.
    if mask_rows or mask_lanes:
        valid = None
        if mask_lanes:
            lane_ids = (pl.program_id(1 - rows_axis) * block_lanes +
                        jax.lax.broadcasted_iota(jnp.int32, (1, block_lanes), 1))
            valid = lane_ids < lanes_total
        if mask_rows:
            row_ids = (pl.program_id(rows_axis) * block_rows +
                       jax.lax.broadcasted_iota(jnp.int32, (block_rows, 1), 0))
            rvalid = row_ids < rows_total
            valid = rvalid if valid is None else jnp.logical_and(valid, rvalid)
        fa = jnp.where(valid, fa, 0.0)
        a = jnp.where(valid, a, 0.0)

    # 5 unweighted per-lane partial sums (sublane reduce only; cross-lane
    # reduction + latitude weighting happen once, in the wrapper).
    # Rows 5..7 of the output tile are intentionally left unwritten — the
    # wrapper only ever reads [:5].
    out_ref[0:1, :] = jnp.sum(fa, axis=0, keepdims=True)        # S_fa
    out_ref[1:2, :] = jnp.sum(a, axis=0, keepdims=True)         # S_a
    out_ref[2:3, :] = jnp.sum(fa * fa, axis=0, keepdims=True)   # S_fa^2
    out_ref[3:4, :] = jnp.sum(a * a, axis=0, keepdims=True)     # S_a^2
    out_ref[4:5, :] = jnp.sum(fa * a, axis=0, keepdims=True)    # S_fa*a


def weighted_acc_loss(da_fc, da_true, clim, lat, mean, std, *,
                      target_block_bytes=None, vmem_limit_bytes=None):
    # TODO(synk): the torch module's pickle may carry per-channel mean/std;
    # modeled here as scalars baked in at trace time.
    B, C, LAT, LON = da_fc.shape

    # Latitude weights exactly as in the torch __init__.
    w_lat = jnp.cos(jnp.deg2rad(lat.astype(jnp.float32)))
    w_lat = w_lat / jnp.mean(w_lat)

    R = B * C
    LANES = LAT * LON

    if target_block_bytes is None or vmem_limit_bytes is None:
        auto_blk, auto_vmem = _pick_budget()
        target_block_bytes = target_block_bytes or auto_blk
        vmem_limit_bytes = vmem_limit_bytes or auto_vmem

    itemsize = jnp.dtype(da_fc.dtype).itemsize
    target_elems = max(target_block_bytes // itemsize, 8 * 128)

    # Lane tile: balanced multiple of 128 (minimizes lane padding), capped so a
    # block with >=8 rows still fits the byte budget.
    lane_cap = max(128, (target_elems // 8) // 128 * 128)
    lane_tile = _balanced_tile(LANES, lane_cap)

    # Row tile from the byte budget; if R is small and the block underfills the
    # budget, grow the lane tile back toward the target (keeps >=2 MiB blocks).
    rows_min = _round_up(R, 8)
    bc_tile = max(8, (target_elems // lane_tile) // 8 * 8)
    if bc_tile >= rows_min:
        bc_tile = rows_min
        lane_cap = max(lane_tile, (target_elems // bc_tile) // 128 * 128)
        lane_tile = _balanced_tile(LANES, lane_cap)

    num_row_blocks = _cdiv(R, bc_tile)
    num_lane_blocks = _cdiv(LANES, lane_tile)
    mask_rows = num_row_blocks * bc_tile != R
    mask_lanes = num_lane_blocks * lane_tile != LANES

    # Put the axis with more blocks first so megacore sharding (v7x, 2 TCs)
    # always sees >=2 blocks on the leading parallel axis.
    if num_row_blocks >= num_lane_blocks:
        grid = (num_row_blocks, num_lane_blocks)
        rows_axis = 0
        in_map = lambda i, j: (i, j)
        out_map = lambda i, j: (i, j, 0, 0)
    else:
        grid = (num_lane_blocks, num_row_blocks)
        rows_axis = 1
        in_map = lambda j, i: (i, j)
        out_map = lambda j, i: (i, j, 0, 0)

    # Unpadded slabs (no jnp.pad pass over HBM; edge blocks masked in-kernel).
    fc2 = da_fc.reshape(R, LANES)
    tr2 = da_true.reshape(R, LANES)
    cl2 = clim.reshape(R, LANES)

    kernel = functools.partial(
        _acc_partials_kernel,
        std=float(std), mean=float(mean),
        rows_total=R, lanes_total=LANES,
        block_rows=bc_tile, block_lanes=lane_tile,
        mask_rows=mask_rows, mask_lanes=mask_lanes,
        rows_axis=rows_axis,
    )

    partials = pl.pallas_call(
        kernel,
        out_shape=jax.ShapeDtypeStruct(
            (num_row_blocks, num_lane_blocks, 8, lane_tile), jnp.float32),
        grid=grid,
        in_specs=[
            pl.BlockSpec((bc_tile, lane_tile), in_map),
            pl.BlockSpec((bc_tile, lane_tile), in_map),
            pl.BlockSpec((bc_tile, lane_tile), in_map),
        ],
        out_specs=pl.BlockSpec((None, None, 8, lane_tile), out_map),
        compiler_params=pltpu.CompilerParams(
            dimension_semantics=("parallel", "parallel"),
            vmem_limit_bytes=vmem_limit_bytes),
    )(fc2, tr2, cl2)

    # ---- Scalar glue in plain JAX (tiny vs. the streamed inputs) ----
    # Per-lane sums (reduce over row blocks), flattened to global lane order.
    per_lane = jnp.sum(partials[:, :, :5, :], axis=0)                 # (nlb, 5, lt)
    per_lane = jnp.moveaxis(per_lane, 1, 0).reshape(5, num_lane_blocks * lane_tile)

    # Latitude weight per global lane (w_lat repeated over LON), zero on padded lanes.
    w_row = jnp.repeat(w_lat, LON)                                    # (LANES,)
    w_full = jnp.zeros((num_lane_blocks * lane_tile,), jnp.float32).at[:LANES].set(w_row)

    sums_unw = jnp.sum(per_lane, axis=1)       # unweighted totals (only [0:2] used)
    sums_w = per_lane @ w_full                 # weighted totals (5,)

    s_fa, s_a = sums_unw[0], sums_unw[1]
    s_wfa, s_wa, s_wfa2, s_wa2, s_wfaa = (sums_w[0], sums_w[1], sums_w[2],
                                          sums_w[3], sums_w[4])

    n = jnp.float32(B * C * LAT * LON)
    # S_w is constant (weights broadcast over B, C, LON) and uses the SAME w_row
    # as the recombination above, so they cannot diverge.
    s_w = jnp.float32(R) * jnp.sum(w_row)

    m_f = s_fa / n
    m_a = s_a / n
    num = s_wfaa - m_a * s_wfa - m_f * s_wa + m_f * m_a * s_w
    den_f = s_wfa2 - 2.0 * m_f * s_wfa + m_f * m_f * s_w
    den_a = s_wa2 - 2.0 * m_a * s_wa + m_a * m_a * s_w
    acc = num / jnp.sqrt(den_f * den_a)
    return 1.0 - acc


def weighted_acc_loss_reference(da_fc, da_true, clim, lat, mean, std):
    """Pure-JAX reference mirroring the torch forward exactly."""
    w_lat = jnp.cos(jnp.deg2rad(lat))
    w_lat = w_lat / jnp.mean(w_lat)
    w = w_lat[None, None, :, None]
    fa = da_fc * std + mean - clim
    a = da_true * std + mean - clim
    fap = fa - jnp.mean(fa)
    ap = a - jnp.mean(a)
    acc = jnp.sum(w * fap * ap) / jnp.sqrt(
        jnp.sum(w * fap**2) * jnp.sum(w * ap**2))
    return 1.0 - acc


if __name__ == "__main__":
    # Deterministic synthetic "scaler" contents (the torch module loads these
    # from a pickle).
    B, C, LAT, LON = 2, 4, 16, 16
    lat = jnp.linspace(-75.0, 75.0, LAT, dtype=jnp.float32)
    mean = 2.5
    std = 1.3

    key = jax.random.PRNGKey(0)
    k1, k2, k3 = jax.random.split(key, 3)
    da_fc = jax.random.normal(k1, (B, C, LAT, LON), dtype=jnp.float32)
    da_true = jax.random.normal(k2, (B, C, LAT, LON), dtype=jnp.float32)
    clim = 2.5 + 0.3 * jax.random.normal(k3, (B, C, LAT, LON), dtype=jnp.float32)

    loss = weighted_acc_loss(da_fc, da_true, clim, lat, mean, std)
    loss = jax.block_until_ready(loss)

    ref = jax.block_until_ready(
        weighted_acc_loss_reference(da_fc, da_true, clim, lat, mean, std))
    np.testing.assert_allclose(np.asarray(loss), np.asarray(ref), rtol=1e-3, atol=1e-3)

    print("KERNEL_OK")
</pallas_src>

<mosaic_0001>
module attributes {stable_mosaic.version = 11 : i64} {
  func.func @_acc_partials_kernel(%arg0: i32, %arg1: i32, %arg2: memref<8x256xf32, #tpu.memory_space<vmem>>, %arg3: memref<8x256xf32, #tpu.memory_space<vmem>>, %arg4: memref<8x256xf32, #tpu.memory_space<vmem>>, %arg5: memref<1x1x8x256xf32, #tpu.memory_space<vmem>>) attributes {dimension_semantics = [#tpu.dimension_semantics<parallel>, #tpu.dimension_semantics<parallel>], iteration_bounds = array<i64: 1, 1>, scalar_prefetch = 0 : i64, scratch_operands = 0 : i64, tpu.core_type = #tpu.core_type<tc>, window_params = [{transform_indices = @transform_0, window_bounds = array<i64: 8, 256>}, {transform_indices = @transform_1, window_bounds = array<i64: 8, 256>}, {transform_indices = @transform_2, window_bounds = array<i64: 8, 256>}, {transform_indices = @transform_3, window_bounds = array<i64: 1, 1, 8, 256>}]} {
    %c0 = arith.constant 0 : index
    %c0_0 = arith.constant 0 : index
    %0 = vector.load %arg2[%c0, %c0_0] : memref<8x256xf32, #tpu.memory_space<vmem>>, vector<8x256xf32>
    %c0_1 = arith.constant 0 : index
    %c0_2 = arith.constant 0 : index
    %1 = vector.load %arg3[%c0_1, %c0_2] : memref<8x256xf32, #tpu.memory_space<vmem>>, vector<8x256xf32>
    %c0_3 = arith.constant 0 : index
    %c0_4 = arith.constant 0 : index
    %2 = vector.load %arg4[%c0_3, %c0_4] : memref<8x256xf32, #tpu.memory_space<vmem>>, vector<8x256xf32>
    %cst = arith.constant 1.300000e+00 : f32
    %3 = vector.broadcast %cst : f32 to vector<8x256xf32>
    %4 = arith.mulf %0, %3 : vector<8x256xf32>
    %cst_5 = arith.constant 2.500000e+00 : f32
    %5 = vector.broadcast %cst_5 : f32 to vector<8x256xf32>
    %6 = arith.addf %4, %5 : vector<8x256xf32>
    %7 = arith.subf %6, %2 : vector<8x256xf32>
    %cst_6 = arith.constant 1.300000e+00 : f32
    %8 = vector.broadcast %cst_6 : f32 to vector<8x256xf32>
    %9 = arith.mulf %1, %8 : vector<8x256xf32>
    %cst_7 = arith.constant 2.500000e+00 : f32
    %10 = vector.broadcast %cst_7 : f32 to vector<8x256xf32>
    %11 = arith.addf %9, %10 : vector<8x256xf32>
    %12 = arith.subf %11, %2 : vector<8x256xf32>
    %cst_8 = arith.constant dense<0.000000e+00> : vector<256xf32>
    %13 = vector.multi_reduction <add>, %7, %cst_8 [0] : vector<8x256xf32> to vector<256xf32>
    %14 = vector.shape_cast %13 : vector<256xf32> to vector<1x256xf32>
    %c0_9 = arith.constant 0 : index
    %c0_10 = arith.constant 0 : index
    %c0_11 = arith.constant 0 : index
    %c0_12 = arith.constant 0 : index
    %15 = vector.load %arg5[%c0_9, %c0_10, %c0_11, %c0_12] : memref<1x1x8x256xf32, #tpu.memory_space<vmem>>, vector<1x1x1x256xf32>
    %16 = vector.shape_cast %15 : vector<1x1x1x256xf32> to vector<1x256xf32>
    %17 = vector.shape_cast %14 : vector<1x256xf32> to vector<1x1x1x256xf32>
    tpu.vector_store %arg5[%c0_9, %c0_10, %c0_11, %c0_12], %17 {strides = array<i32>} : memref<1x1x8x256xf32, #tpu.memory_space<vmem>>, vector<1x1x1x256xf32>,
    %cst_13 = arith.constant dense<0.000000e+00> : vector<256xf32>
    %18 = vector.multi_reduction <add>, %12, %cst_13 [0] : vector<8x256xf32> to vector<256xf32>
    %19 = vector.shape_cast %18 : vector<256xf32> to vector<1x256xf32>
    %c0_14 = arith.constant 0 : index
    %c0_15 = arith.constant 0 : index
    %c1 = arith.constant 1 : index
    %c0_16 = arith.constant 0 : index
    %20 = vector.load %arg5[%c0_14, %c0_15, %c1, %c0_16] : memref<1x1x8x256xf32, #tpu.memory_space<vmem>>, vector<1x1x1x256xf32>
    %21 = vector.shape_cast %20 : vector<1x1x1x256xf32> to vector<1x256xf32>
    %22 = vector.shape_cast %19 : vector<1x256xf32> to vector<1x1x1x256xf32>
    tpu.vector_store %arg5[%c0_14, %c0_15, %c1, %c0_16], %22 {strides = array<i32>} : memref<1x1x8x256xf32, #tpu.memory_space<vmem>>, vector<1x1x1x256xf32>,
    %23 = arith.mulf %7, %7 : vector<8x256xf32>
    %cst_17 = arith.constant dense<0.000000e+00> : vector<256xf32>
    %24 = vector.multi_reduction <add>, %23, %cst_17 [0] : vector<8x256xf32> to vector<256xf32>
    %25 = vector.shape_cast %24 : vector<256xf32> to vector<1x256xf32>
    %c0_18 = arith.constant 0 : index
    %c0_19 = arith.constant 0 : index
    %c2 = arith.constant 2 : index
    %c0_20 = arith.constant 0 : index
    %26 = vector.load %arg5[%c0_18, %c0_19, %c2, %c0_20] : memref<1x1x8x256xf32, #tpu.memory_space<vmem>>, vector<1x1x1x256xf32>
    %27 = vector.shape_cast %26 : vector<1x1x1x256xf32> to vector<1x256xf32>
    %28 = vector.shape_cast %25 : vector<1x256xf32> to vector<1x1x1x256xf32>
    tpu.vector_store %arg5[%c0_18, %c0_19, %c2, %c0_20], %28 {strides = array<i32>} : memref<1x1x8x256xf32, #tpu.memory_space<vmem>>, vector<1x1x1x256xf32>,
    %29 = arith.mulf %12, %12 : vector<8x256xf32>
    %cst_21 = arith.constant dense<0.000000e+00> : vector<256xf32>
    %30 = vector.multi_reduction <add>, %29, %cst_21 [0] : vector<8x256xf32> to vector<256xf32>
    %31 = vector.shape_cast %30 : vector<256xf32> to vector<1x256xf32>
    %c0_22 = arith.constant 0 : index
    %c0_23 = arith.constant 0 : index
    %c3 = arith.constant 3 : index
    %c0_24 = arith.constant 0 : index
    %32 = vector.load %arg5[%c0_22, %c0_23, %c3, %c0_24] : memref<1x1x8x256xf32, #tpu.memory_space<vmem>>, vector<1x1x1x256xf32>
    %33 = vector.shape_cast %32 : vector<1x1x1x256xf32> to vector<1x256xf32>
    %34 = vector.shape_cast %31 : vector<1x256xf32> to vector<1x1x1x256xf32>
    tpu.vector_store %arg5[%c0_22, %c0_23, %c3, %c0_24], %34 {strides = array<i32>} : memref<1x1x8x256xf32, #tpu.memory_space<vmem>>, vector<1x1x1x256xf32>,
    %35 = arith.mulf %7, %12 : vector<8x256xf32>
    %cst_25 = arith.constant dense<0.000000e+00> : vector<256xf32>
    %36 = vector.multi_reduction <add>, %35, %cst_25 [0] : vector<8x256xf32> to vector<256xf32>
    %37 = vector.shape_cast %36 : vector<256xf32> to vector<1x256xf32>
    %c0_26 = arith.constant 0 : index
    %c0_27 = arith.constant 0 : index
    %c4 = arith.constant 4 : index
    %c0_28 = arith.constant 0 : index
    %38 = vector.load %arg5[%c0_26, %c0_27, %c4, %c0_28] : memref<1x1x8x256xf32, #tpu.memory_space<vmem>>, vector<1x1x1x256xf32>
    %39 = vector.shape_cast %38 : vector<1x1x1x256xf32> to vector<1x256xf32>
    %40 = vector.shape_cast %37 : vector<1x256xf32> to vector<1x1x1x256xf32>
    tpu.vector_store %arg5[%c0_26, %c0_27, %c4, %c0_28], %40 {strides = array<i32>} : memref<1x1x8x256xf32, #tpu.memory_space<vmem>>, vector<1x1x1x256xf32>,
    return
  }
  func.func @transform_0(%arg0: i32, %arg1: i32) -> (i32, i32) {
    %c0_i32 = arith.constant 0 : i32
    return %arg0, %arg1 : i32, i32
  }
  func.func @transform_1(%arg0: i32, %arg1: i32) -> (i32, i32) {
    %c0_i32 = arith.constant 0 : i32
    return %arg0, %arg1 : i32, i32
  }
  func.func @transform_2(%arg0: i32, %arg1: i32) -> (i32, i32) {
    %c0_i32 = arith.constant 0 : i32
    return %arg0, %arg1 : i32, i32
  }
  func.func @transform_3(%arg0: i32, %arg1: i32) -> (i32, i32, i32, i32) {
    %c0_i32 = arith.constant 0 : i32
    %c0_i32_0 = arith.constant 0 : i32
    %c0_i32_1 = arith.constant 0 : i32
    return %arg0, %arg1, %c0_i32, %c0_i32_0 : i32, i32, i32, i32
  }
}

</mosaic_0001>

<llo_original>
// kernel: tpu_custom_call.1
$region0: #{tpu_custom_call.1}
  #allocation0 [shape = 'u32[]', space=smem, size = 0x4, offset = 0x4, fixed_abs, tag = 'smem constant byte address 0x4 - core index']
  #allocation1 [shape = 'u32[144,128]{1,0:T(1,128)}', space=vmem, size = 0x12000, scoped, tag = 'internal scratch']
  %s0 = inlined_call_operand.hbm [shape: f32[8,256], index: 0, kind: input, shape index: {}]
  %s1 = inlined_call_operand.hbm [shape: f32[8,256], index: 1, kind: input, shape index: {}]
  %s2 = inlined_call_operand.hbm [shape: f32[8,256], index: 2, kind: input, shape index: {}]
  %s3 = inlined_call_operand.hbm [shape: f32[1,1,8,256], index: 3, kind: output, shape index: {}]
  %s4 = sld [smem:[#allocation0]]
  $region34: #{tpu_custom_call.1} parent=0
    _
  %s6 = ssub.s32 1, %s4
  %s7 = scalar_select 0, %s6, %s4
  $region1: #{tpu_custom_call.1} parent=0
    #allocation2 [shape = 'u8[8192]{0}', space=vmem, size = 0x2000, scoped, tag = 'input window, operand 0, single buffered']
    #allocation3 [shape = 's32[1]{0}', space=sflag, size = 0x4, scoped, tag = 'scoped memory for tpu_custom_call.1']
    #allocation4 [shape = 's32[1]{0}', space=sflag, size = 0x4, scoped, tag = 'scoped memory for tpu_custom_call.1']
    #allocation5 [shape = 'u8[8192]{0}', space=vmem, size = 0x2000, scoped, tag = 'input window, operand 1, single buffered']
    #allocation6 [shape = 's32[1]{0}', space=sflag, size = 0x4, scoped, tag = 'scoped memory for tpu_custom_call.1']
    #allocation7 [shape = 'u8[8192]{0}', space=vmem, size = 0x2000, scoped, tag = 'input window, operand 2, single buffered']
    #allocation8 [shape = 'u8[8192]{0}', space=vmem, size = 0x2000, scoped, tag = 'output window, operand 0, single buffered']
    %8 = vsyncpa [#allocation3], 0
    %9 = vsyncpa [#allocation6], 0
    %10 = vsyncpa [#allocation4], 0
    // Predicated region
    $region2: #{tpu_custom_call.1} parent=1 // pred_check
      _
    $region3: #{tpu_custom_call.1} parent=1 // pred_check_branch
      %12 = sbr.rel (0) target = $region5
    $region4: #{tpu_custom_call.1} parent=1 // pred_region
      %s14 = ssub.s32 256, 256
      %15 = vsyncadd [#allocation3], %s14
      %s17 = sshll.u32 [#allocation2], 4
      %s18 = int_to_ptr.vmem [resolvable:$true] %s17
      %20 = dma.hbm_to_vmem [thread:$0]  %s0, 256, %s18, [#allocation3]
    $region5: #{tpu_custom_call.1} parent=1 // pred_fallthru
      _
    // Predicated region
    $region6: #{tpu_custom_call.1} parent=1 // pred_check
      _
    $region7: #{tpu_custom_call.1} parent=1 // pred_check_branch
      %22 = sbr.rel (0) target = $region9
    $region8: #{tpu_custom_call.1} parent=1 // pred_region
      %s24 = ssub.s32 256, 256
      %25 = vsyncadd [#allocation6], %s24
      %s27 = sshll.u32 [#allocation5], 4
      %s28 = int_to_ptr.vmem [resolvable:$true] %s27
      %30 = dma.hbm_to_vmem [thread:$0]  %s1, 256, %s28, [#allocation6]
    $region9: #{tpu_custom_call.1} parent=1 // pred_fallthru
      _
    // Predicated region
    $region10: #{tpu_custom_call.1} parent=1 // pred_check
      _
    $region11: #{tpu_custom_call.1} parent=1 // pred_check_branch
      %32 = sbr.rel (0) target = $region13
    $region12: #{tpu_custom_call.1} parent=1 // pred_region
      %s34 = ssub.s32 256, 256
      %35 = vsyncadd [#allocation6], %s34
      %s37 = sshll.u32 [#allocation7], 4
      %s38 = int_to_ptr.vmem [resolvable:$true] %s37
      %40 = dma.hbm_to_vmem [thread:$0]  %s2, 256, %s38, [#allocation6]
    $region13: #{tpu_custom_call.1} parent=1 // pred_fallthru
      _
    // Predicated region
    $region14: #{tpu_custom_call.1} parent=1 // pred_check
      _
    $region15: #{tpu_custom_call.1} parent=1 // pred_check_branch
      %42 = sbr.rel (0) target = $region17
    $region16: #{tpu_custom_call.1} parent=1 // pred_region
      %43 = dma.done [#allocation3], 256
    $region17: #{tpu_custom_call.1} parent=1 // pred_fallthru
      _
    // Predicated region
    $region18: #{tpu_custom_call.1} parent=1 // pred_check
      _
    $region19: #{tpu_custom_call.1} parent=1 // pred_check_branch
      %45 = sbr.rel (0) target = $region21
    $region20: #{tpu_custom_call.1} parent=1 // pred_region
      %46 = dma.done [#allocation6], 256
    $region21: #{tpu_custom_call.1} parent=1 // pred_fallthru
      _
    // Predicated region
    $region22: #{tpu_custom_call.1} parent=1 // pred_check
      _
    $region23: #{tpu_custom_call.1} parent=1 // pred_check_branch
      %48 = sbr.rel (0) target = $region25
    $region24: #{tpu_custom_call.1} parent=1 // pred_region
      %49 = dma.done [#allocation6], 256
    $region25: #{tpu_custom_call.1} parent=1 // pred_fallthru
      _
    %v50 = vld [vmem:[#allocation2] sm:$0xff]
    %v51 = vld [vmem:[#allocation2 + $0x8] sm:$0xff]
    %v52 = vld [vmem:[#allocation5] sm:$0xff]
    %v53 = vld [vmem:[#allocation5 + $0x8] sm:$0xff]
    %v54 = vld [vmem:[#allocation7] sm:$0xff]
    %v55 = vld [vmem:[#allocation7 + $0x8] sm:$0xff]
    %v56 = vmul.f32 %v50, 1.3
    %v57 = vmul.f32 %v51, 1.3
    %v58 = vadd.f32 %v56, 2.5
    %v59 = vadd.f32 %v57, 2.5
    %v60 = vsub.f32 %v58, %v54
    %v61 = vsub.f32 %v59, %v55
    %v62 = vmul.f32 %v52, 1.3
    %v63 = vmul.f32 %v53, 1.3
    %v64 = vadd.f32 %v62, 2.5
    %v65 = vadd.f32 %v63, 2.5
    %v66 = vsub.f32 %v64, %v54
    %v67 = vsub.f32 %v65, %v55
    %v68 = vrot.slane %v60, 4
    %v69 = vadd.f32 %v60, %v68
    %v70 = vrot.slane %v69, 2
    %v71 = vadd.f32 %v69, %v70
    %v72 = vrot.slane %v71, 1
    %v73 = vadd.f32 %v71, %v72
    %v74 = vrot.slane %v61, 4
    %v75 = vadd.f32 %v61, %v74
    %v76 = vrot.slane %v75, 2
    %v77 = vadd.f32 %v75, %v76
    %v78 = vrot.slane %v77, 1
    %v79 = vadd.f32 %v77, %v78
    %v82 = vcombine.low %v73, %v79
    %v84 = vunpack.c.l.s4 1966171168
    %v85 = vunpack.c.0.s8 %v84
    %v86 = vlaneseq
    %v87 = vshrl.u32 %v86, 7
    %v88 = vsub.s32 %v85, %v87
    %v89 = vrot.slane %v82, %v88
    %v91 = vunpack.c.l.s4 1966171168
    %v92 = vunpack.c.0.s8 %v91
    %v93 = vlaneseq
    %v94 = vshrl.u32 %v93, 7
    %v95 = vsub.s32 %v92, %v94
    %v96 = vrot.slane %v89, %v95
    %v98 = vlaneseq
    %vm99 = vcmp.ge.s32.totalorder %v98, 0
    %vm100 = vcmp.lt.s32.totalorder %v98, 256
    %vm101 = vmand %vm99, %vm100
    %102 = vst.msk [vmem:[#allocation8] ss:$8 sm:$0x3] %vm101, %v96
    %103 = vst.msk [vmem:[#allocation8] ss:$8 sm:$0x0] %vm101, %v96
    %v104 = vrot.slane %v66, 4
    %v105 = vadd.f32 %v66, %v104
    %v106 = vrot.slane %v105, 2
    %v107 = vadd.f32 %v105, %v106
    %v108 = vrot.slane %v107, 1
    %v109 = vadd.f32 %v107, %v108
    %v110 = vrot.slane %v67, 4
    %v111 = vadd.f32 %v67, %v110
    %v112 = vrot.slane %v111, 2
    %v113 = vadd.f32 %v111, %v112
    %v114 = vrot.slane %v113, 1
    %v115 = vadd.f32 %v113, %v114
    %v118 = vcombine.low %v109, %v115
    %v120 = vunpack.c.l.s4 1966171168
    %v121 = vunpack.c.0.s8 %v120
    %v122 = vlaneseq
    %v123 = vshrl.u32 %v122, 7
    %v124 = vsub.s32 %v121, %v123
    %v125 = vrot.slane %v118, %v124
    %v127 = vunpack.c.l.s4 1966171168
    %v128 = vunpack.c.0.s8 %v127
    %v129 = vlaneseq
    %v130 = vshrl.u32 %v129, 7
    %v131 = vsub.s32 %v128, %v130
    %v132 = vrot.slane %v125, %v131
    %s134 = scalar_lea.vmem [#allocation8], 1
    %135 = vst.msk [vmem:[%s134] ss:$8 sm:$0x3] %vm101, %v132
    %136 = vst.msk [vmem:[%s134] ss:$8 sm:$0x0] %vm101, %v132
    %v137 = vmul.f32 %v60, %v60
    %v138 = vmul.f32 %v61, %v61
    %v139 = vrot.slane %v137, 4
    %v140 = vadd.f32 %v137, %v139
    %v141 = vrot.slane %v140, 2
    %v142 = vadd.f32 %v140, %v141
    %v143 = vrot.slane %v142, 1
    %v144 = vadd.f32 %v142, %v143
    %v145 = vrot.slane %v138, 4
    %v146 = vadd.f32 %v138, %v145
    %v147 = vrot.slane %v146, 2
    %v148 = vadd.f32 %v146, %v147
    %v149 = vrot.slane %v148, 1
    %v150 = vadd.f32 %v148, %v149
    %v153 = vcombine.low %v144, %v150
    %v155 = vunpack.c.l.s4 1966171168
    %v156 = vunpack.c.0.s8 %v155
    %v157 = vlaneseq
    %v158 = vshrl.u32 %v157, 7
    %v159 = vsub.s32 %v156, %v158
    %v160 = vrot.slane %v153, %v159
    %v162 = vunpack.c.l.s4 1966171168
    %v163 = vunpack.c.0.s8 %v162
    %v164 = vlaneseq
    %v165 = vshrl.u32 %v164, 7
    %v166 = vsub.s32 %v163, %v165
    %v167 = vrot.slane %v160, %v166
    %s169 = scalar_lea.vmem [#allocation8], 2
    %170 = vst.msk [vmem:[%s169] ss:$8 sm:$0x3] %vm101, %v167
    %171 = vst.msk [vmem:[%s169] ss:$8 sm:$0x0] %vm101, %v167
    %v172 = vmul.f32 %v66, %v66
    %v173 = vmul.f32 %v67, %v67
    %v174 = vrot.slane %v172, 4
    %v175 = vadd.f32 %v172, %v174
    %v176 = vrot.slane %v175, 2
    %v177 = vadd.f32 %v175, %v176
    %v178 = vrot.slane %v177, 1
    %v179 = vadd.f32 %v177, %v178
    %v180 = vrot.slane %v173, 4
    %v181 = vadd.f32 %v173, %v180
    %v182 = vrot.slane %v181, 2
    %v183 = vadd.f32 %v181, %v182
    %v184 = vrot.slane %v183, 1
    %v185 = vadd.f32 %v183, %v184
    %v188 = vcombine.low %v179, %v185
    %v190 = vunpack.c.l.s4 1966171168
    %v191 = vunpack.c.0.s8 %v190
    %v192 = vlaneseq
    %v193 = vshrl.u32 %v192, 7
    %v194 = vsub.s32 %v191, %v193
    %v195 = vrot.slane %v188, %v194
    %v197 = vunpack.c.l.s4 1966171168
    %v198 = vunpack.c.0.s8 %v197
    %v199 = vlaneseq
    %v200 = vshrl.u32 %v199, 7
    %v201 = vsub.s32 %v198, %v200
    %v202 = vrot.slane %v195, %v201
    %s204 = scalar_lea.vmem [#allocation8], 3
    %205 = vst.msk [vmem:[%s204] ss:$8 sm:$0x3] %vm101, %v202
    %206 = vst.msk [vmem:[%s204] ss:$8 sm:$0x0] %vm101, %v202
    %v207 = vmul.f32 %v60, %v66
    %v208 = vmul.f32 %v61, %v67
    %v209 = vrot.slane %v207, 4
    %v210 = vadd.f32 %v207, %v209
    %v211 = vrot.slane %v210, 2
    %v212 = vadd.f32 %v210, %v211
    %v213 = vrot.slane %v212, 1
    %v214 = vadd.f32 %v212, %v213
    %v215 = vrot.slane %v208, 4
    %v216 = vadd.f32 %v208, %v215
    %v217 = vrot.slane %v216, 2
    %v218 = vadd.f32 %v216, %v217
    %v219 = vrot.slane %v218, 1
    %v220 = vadd.f32 %v218, %v219
    %v223 = vcombine.low %v214, %v220
    %v225 = vunpack.c.l.s4 1966171168
    %v226 = vunpack.c.0.s8 %v225
    %v227 = vlaneseq
    %v228 = vshrl.u32 %v227, 7
    %v229 = vsub.s32 %v226, %v228
    %v230 = vrot.slane %v223, %v229
    %v232 = vunpack.c.l.s4 1966171168
    %v233 = vunpack.c.0.s8 %v232
    %v234 = vlaneseq
    %v235 = vshrl.u32 %v234, 7
    %v236 = vsub.s32 %v233, %v235
    %v237 = vrot.slane %v230, %v236
    %s239 = scalar_lea.vmem [#allocation8], 4
    %240 = vst.msk [vmem:[%s239] ss:$8 sm:$0x3] %vm101, %v237
    %241 = vst.msk [vmem:[%s239] ss:$8 sm:$0x0] %vm101, %v237
    // Predicated region
    $region26: #{tpu_custom_call.1} parent=1 // pred_check
      _
    $region27: #{tpu_custom_call.1} parent=1 // pred_check_branch
      %243 = sbr.rel (0) target = $region29
    $region28: #{tpu_custom_call.1} parent=1 // pred_region
      %s245 = ssub.s32 256, 256
      %246 = vsyncadd [#allocation4], %s245
      %s248 = sshll.u32 [#allocation8], 4
      %s249 = int_to_ptr.vmem [resolvable:$true] %s248
      %251 = dma.vmem_to_hbm [thread:$0]  %s249, 256, %s3, [#allocation4]
    $region29: #{tpu_custom_call.1} parent=1 // pred_fallthru
      _
    // Predicated region
    $region30: #{tpu_custom_call.1} parent=1 // pred_check
      _
    $region31: #{tpu_custom_call.1} parent=1 // pred_check_branch
      %253 = sbr.rel (0) target = $region33
    $region32: #{tpu_custom_call.1} parent=1 // pred_region
      %254 = dma.done [#allocation4], 256
    $region33: #{tpu_custom_call.1} parent=1 // pred_fallthru
      _
    %255 = vsyncpa [#allocation3], 1
    %256 = vsyncpa [#allocation6], 1
    %257 = vsyncpa [#allocation4], 1

</llo_original>
